<compile_context>
chip_gen: v6e
topology: v6e:2x2x1
jax: 0.10.0
libtpu: 0.0.40
codegen_flags: <defaults>
</compile_context>

<pallas_src>
import jax
import jax.numpy as jnp
from jax.experimental import pallas as pl
from jax.experimental.pallas import tpu as pltpu


def mlp_kernel(x_ref, w1_ref, b1_ref, w2_ref, b2_ref, o_ref):
    # x_ref: (tm, H) bf16 | w1_ref: (H, H2) bf16 | b1_ref: (1, H2) f32
    # w2_ref: (H2, H) bf16 | b2_ref: (1, H) f32  | o_ref: (tm, H) out dtype
    h = jnp.dot(x_ref[...], w1_ref[...], preferred_element_type=jnp.float32)
    h = jnp.maximum(h + b1_ref[...], 0.0)          # bias + ReLU in f32 on the VPU
    # dropout: identity in eval mode
    o = jnp.dot(h.astype(w2_ref.dtype), w2_ref[...],
                preferred_element_type=jnp.float32)
    o_ref[...] = (o + b2_ref[...]).astype(o_ref.dtype)


def mlp_forward(x, w1, b1, w2, b2, *, tm=512,
                compute_dtype=jnp.bfloat16,
                vmem_limit_bytes=48 * 1024 * 1024):
    """x: (B, S, H). w1: (H, 2H), b1: (1, 2H), w2: (2H, H), b2: (1, H)."""
    B, S, H = x.shape
    H2 = w1.shape[1]
    M = B * S
    out_dtype = x.dtype

    # bf16 operands hit the MXU's native path and halve weight VMEM/HBM traffic.
    x2d = x.reshape(M, H).astype(compute_dtype)
    w1c = w1.astype(compute_dtype)
    w2c = w2.astype(compute_dtype)
    b1c = b1.astype(jnp.float32)
    b2c = b2.astype(jnp.float32)

    # Row tile: as large as possible (fills the 256-wide MXU, amortizes the
    # ~0.35us per-grid-step overhead), but clamped so small problems still get
    # >= 2 grid steps ("parallel" axis can then shard across both v7x TCs).
    tm_eff = min(tm, M)
    if M >= 16 and M // tm_eff < 2:
        tm_eff = max(8, ((M // 2 + 7) // 8) * 8)
    M_pad = pl.cdiv(M, tm_eff) * tm_eff
    if M_pad != M:
        x2d = jnp.pad(x2d, ((0, M_pad - M), (0, 0)))
    grid = (M_pad // tm_eff,)

    in_bytes = jnp.dtype(compute_dtype).itemsize
    out_bytes = jnp.dtype(out_dtype).itemsize
    cost = pl.CostEstimate(
        flops=4 * M_pad * H * H2,  # two matmuls, 2*M*H*H2 each
        transcendentals=0,
        bytes_accessed=(M_pad * H * in_bytes            # x in
                        + M_pad * H * out_bytes         # out
                        + 2 * H * H2 * in_bytes         # W1 + W2 (resident)
                        + (H2 + H) * 4),                # biases
    )

    out2d = pl.pallas_call(
        mlp_kernel,
        out_shape=jax.ShapeDtypeStruct((M_pad, H), out_dtype),
        grid_spec=pltpu.PrefetchScalarGridSpec(
            num_scalar_prefetch=0,
            grid=grid,
            in_specs=[
                pl.BlockSpec((tm_eff, H), lambda i: (i, 0)),   # x row tile (pipelined)
                # Weights / biases use constant index_maps: Pallas keeps them
                # resident and skips the re-DMA across grid steps.
                pl.BlockSpec((H, H2), lambda i: (0, 0)),       # W1 (full, resident)
                pl.BlockSpec((1, H2), lambda i: (0, 0)),       # b1
                pl.BlockSpec((H2, H), lambda i: (0, 0)),       # W2 (full, resident)
                pl.BlockSpec((1, H), lambda i: (0, 0)),        # b2
            ],
            out_specs=pl.BlockSpec((tm_eff, H), lambda i: (i, 0)),
        ),
        compiler_params=pltpu.CompilerParams(
            dimension_semantics=("parallel",),
            vmem_limit_bytes=vmem_limit_bytes,
        ),
        cost_estimate=cost,
    )(x2d, w1c, b1c, w2c, b2c)

    return out2d[:M].reshape(B, S, H)


def mlp_reference(x, w1, b1, w2, b2):
    h = jnp.maximum(x @ w1 + b1, 0.0)
    return h @ w2 + b2


if __name__ == "__main__":
    # Small shapes consistent with the module (real config uses hidden_size=1024):
    # hidden=128, seq=8, batch=2.
    B, S, H = 2, 8, 128
    H2 = 2 * H

    key = jax.random.PRNGKey(0)
    kx, k1, k2, k3, k4 = jax.random.split(key, 5)

    x = jax.random.normal(kx, (B, S, H), dtype=jnp.float32)

    # Deterministic param init (PyTorch Linear shapes are (out, in); stored transposed).
    bound1 = 1.0 / (H ** 0.5)
    w1 = jax.random.uniform(k1, (H, H2), minval=-bound1, maxval=bound1, dtype=jnp.float32)
    b1 = jax.random.uniform(k2, (1, H2), minval=-bound1, maxval=bound1, dtype=jnp.float32)
    bound2 = 1.0 / (H2 ** 0.5)
    w2 = jax.random.uniform(k3, (H2, H), minval=-bound2, maxval=bound2, dtype=jnp.float32)
    b2 = jax.random.uniform(k4, (1, H), minval=-bound2, maxval=bound2, dtype=jnp.float32)

    out = mlp_forward(x, w1, b1, w2, b2)
    jax.block_until_ready(out)

    ref = mlp_reference(x.reshape(B * S, H), w1, b1, w2, b2).reshape(B, S, H)
    assert out.shape == (B, S, H)
    # bf16 operands (f32 accumulation) -> looser tolerance than pure f32.
    err = float(jnp.max(jnp.abs(out - ref)))
    assert jnp.allclose(out, ref, atol=2e-2, rtol=2e-2), err

    print("KERNEL_OK")
</pallas_src>

<mosaic_0001>
module attributes {stable_mosaic.version = 11 : i64} {
  func.func @mlp_kernel(%arg0: i32, %arg1: memref<8x128xbf16, #tpu.memory_space<vmem>>, %arg2: memref<128x256xbf16, #tpu.memory_space<vmem>>, %arg3: memref<1x256xf32, #tpu.memory_space<vmem>>, %arg4: memref<256x128xbf16, #tpu.memory_space<vmem>>, %arg5: memref<1x128xf32, #tpu.memory_space<vmem>>, %arg6: memref<8x128xf32, #tpu.memory_space<vmem>>) attributes {dimension_semantics = [#tpu.dimension_semantics<parallel>], iteration_bounds = array<i64: 2>, scalar_prefetch = 0 : i64, scratch_operands = 0 : i64, tpu.core_type = #tpu.core_type<tc>, window_params = [{transform_indices = @transform_0, window_bounds = array<i64: 8, 128>}, {pipeline_mode = #tpu.pipeline_mode<synchronous>, transform_indices = @transform_1, window_bounds = array<i64: 128, 256>}, {pipeline_mode = #tpu.pipeline_mode<synchronous>, transform_indices = @transform_2, window_bounds = array<i64: 1, 256>}, {pipeline_mode = #tpu.pipeline_mode<synchronous>, transform_indices = @transform_3, window_bounds = array<i64: 256, 128>}, {pipeline_mode = #tpu.pipeline_mode<synchronous>, transform_indices = @transform_4, window_bounds = array<i64: 1, 128>}, {transform_indices = @transform_5, window_bounds = array<i64: 8, 128>}]} {
    %c0 = arith.constant 0 : index
    %c0_0 = arith.constant 0 : index
    %0 = vector.load %arg1[%c0, %c0_0] : memref<8x128xbf16, #tpu.memory_space<vmem>>, vector<8x128xbf16>
    %c0_1 = arith.constant 0 : index
    %c0_2 = arith.constant 0 : index
    %1 = vector.load %arg2[%c0_1, %c0_2] : memref<128x256xbf16, #tpu.memory_space<vmem>>, vector<128x256xbf16>
    %cst = arith.constant dense<0.000000e+00> : vector<8x256xf32>
    %2 = tpu.matmul %0, %1, %cst {dimension_numbers = #tpu.dot_dimension_numbers<[1], [0], [0], [1], [0, 0, 1, 1], [], []>} : vector<8x128xbf16>, vector<128x256xbf16>, vector<8x256xf32> -> vector<8x256xf32>
    %c0_3 = arith.constant 0 : index
    %c0_4 = arith.constant 0 : index
    %3 = vector.load %arg3[%c0_3, %c0_4] : memref<1x256xf32, #tpu.memory_space<vmem>>, vector<1x256xf32>
    %4 = vector.broadcast %3 : vector<1x256xf32> to vector<8x256xf32>
    %5 = arith.addf %2, %4 : vector<8x256xf32>
    %cst_5 = arith.constant 0.000000e+00 : f32
    %6 = vector.broadcast %cst_5 : f32 to vector<8x256xf32>
    %7 = arith.maximumf %5, %6 : vector<8x256xf32>
    %8 = arith.truncf %7 : vector<8x256xf32> to vector<8x256xbf16>
    %c0_6 = arith.constant 0 : index
    %c0_7 = arith.constant 0 : index
    %9 = vector.load %arg4[%c0_6, %c0_7] : memref<256x128xbf16, #tpu.memory_space<vmem>>, vector<256x128xbf16>
    %cst_8 = arith.constant dense<0.000000e+00> : vector<8x128xf32>
    %10 = tpu.matmul %8, %9, %cst_8 {dimension_numbers = #tpu.dot_dimension_numbers<[1], [0], [0], [1], [0, 0, 1, 1], [], []>} : vector<8x256xbf16>, vector<256x128xbf16>, vector<8x128xf32> -> vector<8x128xf32>
    %c0_9 = arith.constant 0 : index
    %c0_10 = arith.constant 0 : index
    %11 = vector.load %arg5[%c0_9, %c0_10] : memref<1x128xf32, #tpu.memory_space<vmem>>, vector<1x128xf32>
    %12 = vector.broadcast %11 : vector<1x128xf32> to vector<8x128xf32>
    %13 = arith.addf %10, %12 : vector<8x128xf32>
    %c0_11 = arith.constant 0 : index
    %c0_12 = arith.constant 0 : index
    %14 = vector.load %arg6[%c0_11, %c0_12] : memref<8x128xf32, #tpu.memory_space<vmem>>, vector<8x128xf32>
    tpu.vector_store %arg6[%c0_11, %c0_12], %13 {strides = array<i32>} : memref<8x128xf32, #tpu.memory_space<vmem>>, vector<8x128xf32>,
    return
  }
  func.func @transform_0(%arg0: i32) -> (i32, i32) {
    %c0_i32 = arith.constant 0 : i32
    %c0_i32_0 = arith.constant 0 : i32
    return %arg0, %c0_i32 : i32, i32
  }
  func.func @transform_1(%arg0: i32) -> (i32, i32) {
    %c0_i32 = arith.constant 0 : i32
    %c0_i32_0 = arith.constant 0 : i32
    %c0_i32_1 = arith.constant 0 : i32
    return %c0_i32, %c0_i32_0 : i32, i32
  }
  func.func @transform_2(%arg0: i32) -> (i32, i32) {
    %c0_i32 = arith.constant 0 : i32
    %c0_i32_0 = arith.constant 0 : i32
    %c0_i32_1 = arith.constant 0 : i32
    return %c0_i32, %c0_i32_0 : i32, i32
  }
  func.func @transform_3(%arg0: i32) -> (i32, i32) {
    %c0_i32 = arith.constant 0 : i32
    %c0_i32_0 = arith.constant 0 : i32
    %c0_i32_1 = arith.constant 0 : i32
    return %c0_i32, %c0_i32_0 : i32, i32
  }
  func.func @transform_4(%arg0: i32) -> (i32, i32) {
    %c0_i32 = arith.constant 0 : i32
    %c0_i32_0 = arith.constant 0 : i32
    %c0_i32_1 = arith.constant 0 : i32
    return %c0_i32, %c0_i32_0 : i32, i32
  }
  func.func @transform_5(%arg0: i32) -> (i32, i32) {
    %c0_i32 = arith.constant 0 : i32
    %c0_i32_0 = arith.constant 0 : i32
    return %arg0, %c0_i32 : i32, i32
  }
}

</mosaic_0001>

<llo_original>
// kernel: tpu_custom_call.1
$region0: #{tpu_custom_call.1}
  #allocation0 [shape = 'u32[]', space=smem, size = 0x4, offset = 0x4, fixed_abs, tag = 'smem constant byte address 0x4 - core index']
  #allocation1 [shape = 'u32[144,128]{1,0:T(1,128)}', space=vmem, size = 0x12000, scoped, tag = 'internal scratch']
  %s0 = inlined_call_operand.hbm [shape: bf16[16,128], index: 0, kind: input, shape index: {}]
  %s1 = inlined_call_operand.hbm [shape: bf16[128,256], index: 1, kind: input, shape index: {}]
  %s2 = inlined_call_operand.vmem [shape: f32[1,256], index: 2, kind: input, shape index: {}]
  %s3 = inlined_call_operand.hbm [shape: bf16[256,128], index: 3, kind: input, shape index: {}]
  %s4 = inlined_call_operand.vmem [shape: f32[1,128], index: 4, kind: input, shape index: {}]
  %s5 = inlined_call_operand.hbm [shape: f32[16,128], index: 5, kind: output, shape index: {}]
  %s6 = sld [smem:[#allocation0]]
  $region65: #{tpu_custom_call.1} parent=0
    _
  %s8 = ssub.s32 1, %s6
  %s9 = scalar_select 0, %s8, %s6
  $region1: #{tpu_custom_call.1} parent=0
    #allocation2 [shape = 'u8[4096]{0}', space=vmem, size = 0x1000, scoped, tag = 'input window, operand 0']
    #allocation3 [shape = 's32[2]{0}', space=sflag, size = 0x8, scoped, tag = 'scoped memory for tpu_custom_call.1']
    #allocation4 [shape = 's32[2]{0}', space=sflag, size = 0x8, scoped, tag = 'scoped memory for tpu_custom_call.1']
    #allocation5 [shape = 'u8[65536]{0}', space=vmem, size = 0x10000, scoped, tag = 'input window, operand 1, single buffered']
    #allocation6 [shape = 's32[1]{0}', space=sflag, size = 0x4, scoped, tag = 'scoped memory for tpu_custom_call.1']
    #allocation7 [shape = 'u8[65536]{0}', space=vmem, size = 0x10000, scoped, tag = 'input window, operand 3, single buffered']
    #allocation8 [shape = 'u8[8192]{0}', space=vmem, size = 0x2000, scoped, tag = 'output window, operand 0']
    %10 = vsyncpa [#allocation3], 0
    %s11 = scalar_lea.sflag [#allocation3], 1
    %12 = vsyncpa %s11, 0
    %13 = vsyncpa [#allocation6], 0
    %14 = vsyncpa [#allocation4], 0
    %s15 = scalar_lea.sflag [#allocation4], 1
    %16 = vsyncpa %s15, 0
    loop: start=0, step=1, limit=4
    $region2: #{tpu_custom_call.1} parent=1 // loop_pre_header
      _
    $region3: #{tpu_custom_call.1} parent=1 // loop_header
      %s18 = sphi 0, %s22
      %p19 = scmp.ge.s32.totalorder %s18, 4
      %s28 = sphi 0, %s30
      %s31 = sphi 0, %s28
      %s32 = sphi 0, %s31
      %s48 = sphi 0, %s32
      %s52 = sphi 0, %s52
      %s54 = sphi 0, %s52
      %s55 = sphi 0, %s54
      %s69 = sphi 0, %s55
      %s73 = sphi 0, %s73
      %s75 = sphi 0, %s73
      %s76 = sphi 0, %s75
      %s90 = sphi 0, %s76
      %s94 = sphi 0, %s94
      %s96 = sphi 0, %s94
      %s97 = sphi 0, %s96
      %s111 = sphi 0, %s97
      %s115 = sphi 0, %s115
      %s117 = sphi 0, %s115
      %s118 = sphi 0, %s117
      %s132 = sphi 0, %s118
      %s138 = sphi 0, %s140
      %s141 = sphi 0, %s138
      %s142 = sphi 0, %s141
      %s158 = sphi 0, %s142
    $region4: #{tpu_custom_call.1} parent=1 // loop_header_branch
      %21 = sbr.rel (%p19) target = $region8
    $region5: #{tpu_custom_call.1} parent=1 // loop_body
      %s23 = ssub.s32 %s18, 1
      %s24 = ssub.s32 %s18, 2
      %s25 = sadd.s32 %s18, 1
      %s26 = ssub.s32 %s18, %s25
      %p27 = scmp.eq.s32.totalorder %s26, 0
      %s29 = sadd.s32 %s28, 1
      %s30 = scalar_select %p27, %s28, %s29
      %p33 = pneg %p27
      %p34 = scmp.eq.s32.totalorder %s18, 1
      %p35 = por %p33, %p34
      %p36 = scmp.ne.s32.totalorder %s28, %s31
      %p37 = scmp.eq.s32.totalorder %s18, 0
      %p38 = por %p36, %p37
      %p39 = scmp.ne.s32.totalorder %s28, %s31
      %p40 = scmp.eq.s32.totalorder %s23, 1
      %p41 = por %p39, %p40
      %p42 = scmp.ne.s32.totalorder %s31, %s32
      %p43 = scmp.eq.s32.totalorder %s23, 0
      %p44 = por %p42, %p43
      %p45 = scmp.ne.s32.totalorder %s31, %s32
      %p46 = scmp.eq.s32.totalorder %s24, 1
      %p47 = por %p45, %p46
      %p49 = scmp.ne.s32.totalorder %s32, %s48
      %p50 = scmp.eq.s32.totalorder %s24, 0
      %p51 = por %p49, %p50
      %s53 = sadd.s32 %s52, 1
      %p56 = scmp.eq.s32.totalorder %s18, 1
      %p57 = scmp.ne.s32.totalorder %s52, %s54
      %p58 = scmp.eq.s32.totalorder %s18, 0
      %p59 = por %p57, %p58
      %p60 = scmp.ne.s32.totalorder %s52, %s54
      %p61 = scmp.eq.s32.totalorder %s23, 1
      %p62 = por %p60, %p61
      %p63 = scmp.ne.s32.totalorder %s54, %s55
      %p64 = scmp.eq.s32.totalorder %s23, 0
      %p65 = por %p63, %p64
      %p66 = scmp.ne.s32.totalorder %s54, %s55
      %p67 = scmp.eq.s32.totalorder %s24, 1
      %p68 = por %p66, %p67
      %p70 = scmp.ne.s32.totalorder %s55, %s69
      %p71 = scmp.eq.s32.totalorder %s24, 0
      %p72 = por %p70, %p71
      %s74 = sadd.s32 %s73, 1
      %p77 = scmp.eq.s32.totalorder %s18, 1
      %p78 = scmp.ne.s32.totalorder %s73, %s75
      %p79 = scmp.eq.s32.totalorder %s18, 0
      %p80 = por %p78, %p79
      %p81 = scmp.ne.s32.totalorder %s73, %s75
      %p82 = scmp.eq.s32.totalorder %s23, 1
      %p83 = por %p81, %p82
      %p84 = scmp.ne.s32.totalorder %s75, %s76
      %p85 = scmp.eq.s32.totalorder %s23, 0
      %p86 = por %p84, %p85
      %p87 = scmp.ne.s32.totalorder %s75, %s76
      %p88 = scmp.eq.s32.totalorder %s24, 1
      %p89 = por %p87, %p88
      %p91 = scmp.ne.s32.totalorder %s76, %s90
      %p92 = scmp.eq.s32.totalorder %s24, 0
      %p93 = por %p91, %p92
      %s95 = sadd.s32 %s94, 1
      %p98 = scmp.eq.s32.totalorder %s18, 1
      %p99 = scmp.ne.s32.totalorder %s94, %s96
      %p100 = scmp.eq.s32.totalorder %s18, 0
      %p101 = por %p99, %p100
      %p102 = scmp.ne.s32.totalorder %s94, %s96
      %p103 = scmp.eq.s32.totalorder %s23, 1
      %p104 = por %p102, %p103
      %p105 = scmp.ne.s32.totalorder %s96, %s97
      %p106 = scmp.eq.s32.totalorder %s23, 0
      %p107 = por %p105, %p106
      %p108 = scmp.ne.s32.totalorder %s96, %s97
      %p109 = scmp.eq.s32.totalorder %s24, 1
      %p110 = por %p108, %p109
      %p112 = scmp.ne.s32.totalorder %s97, %s111
      %p113 = scmp.eq.s32.totalorder %s24, 0
      %p114 = por %p112, %p113
      %s116 = sadd.s32 %s115, 1
      %p119 = scmp.eq.s32.totalorder %s18, 1
      %p120 = scmp.ne.s32.totalorder %s115, %s117
      %p121 = scmp.eq.s32.totalorder %s18, 0
      %p122 = por %p120, %p121
      %p123 = scmp.ne.s32.totalorder %s115, %s117
      %p124 = scmp.eq.s32.totalorder %s23, 1
      %p125 = por %p123, %p124
      %p126 = scmp.ne.s32.totalorder %s117, %s118
      %p127 = scmp.eq.s32.totalorder %s23, 0
      %p128 = por %p126, %p127
      %p129 = scmp.ne.s32.totalorder %s117, %s118
      %p130 = scmp.eq.s32.totalorder %s24, 1
      %p131 = por %p129, %p130
      %p133 = scmp.ne.s32.totalorder %s118, %s132
      %p134 = scmp.eq.s32.totalorder %s24, 0
      %p135 = por %p133, %p134
      %s136 = ssub.s32 %s18, %s25
      %p137 = scmp.eq.s32.totalorder %s136, 0
      %s139 = sadd.s32 %s138, 1
      %s140 = scalar_select %p137, %s138, %s139
      %p143 = pneg %p137
      %p144 = scmp.eq.s32.totalorder %s18, 1
      %p145 = por %p143, %p144
      %p146 = scmp.ne.s32.totalorder %s138, %s141
      %p147 = scmp.eq.s32.totalorder %s18, 0
      %p148 = por %p146, %p147
      %p149 = scmp.ne.s32.totalorder %s138, %s141
      %p150 = scmp.eq.s32.totalorder %s23, 1
      %p151 = por %p149, %p150
      %p152 = scmp.ne.s32.totalorder %s141, %s142
      %p153 = scmp.eq.s32.totalorder %s23, 0
      %p154 = por %p152, %p153
      %p155 = scmp.ne.s32.totalorder %s141, %s142
      %p156 = scmp.eq.s32.totalorder %s24, 1
      %p157 = por %p155, %p156
      %p159 = scmp.ne.s32.totalorder %s142, %s158
      %p160 = scmp.eq.s32.totalorder %s24, 0
      %p161 = por %p159, %p160
      %p162 = scmp.le.s32.totalorder 1, %s18
      %p163 = scmp.lt.s32.totalorder %s18, 3
      %p164 = pnand %p162, %p163
      %p165 = pneg %p164
      // Predicated region
      $region9: #{tpu_custom_call.1} parent=5 // pred_check
        _
      $region10: #{tpu_custom_call.1} parent=5 // pred_check_branch
        %167 = sbr.rel (%p164) target = $region12
      $region11: #{tpu_custom_call.1} parent=5 // pred_region
        %s168 = ssub.s32 %s18, 1
        // Predicated region
        $region13: #{tpu_custom_call.1} parent=11 // pred_check
          %p169 = pneg %p65
        $region14: #{tpu_custom_call.1} parent=11 // pred_check_branch
          %171 = sbr.rel (%p169) target = $region16
        $region15: #{tpu_custom_call.1} parent=11 // pred_region
          %s173 = ssub.s32 2048, 2048
          %174 = vsyncadd [#allocation6], %s173
          %s175 = sshll.u32 [#allocation5], 4
          %s176 = int_to_ptr.vmem [resolvable:$true] %s175
          %181 = dma.hbm_to_vmem [thread:$0]  %s1, 2048, %s176, [#allocation6], 128, 128, 8
        $region16: #{tpu_custom_call.1} parent=11 // pred_fallthru
          _
        // Predicated region
        $region17: #{tpu_custom_call.1} parent=11 // pred_check
          %p182 = pneg %p86
        $region18: #{tpu_custom_call.1} parent=11 // pred_check_branch
          %184 = sbr.rel (%p182) target = $region20
        $region19: #{tpu_custom_call.1} parent=11 // pred_region
          _
        $region20: #{tpu_custom_call.1} parent=11 // pred_fallthru
          _
        // Predicated region
        $region21: #{tpu_custom_call.1} parent=11 // pred_check
          %p185 = pneg %p107
        $region22: #{tpu_custom_call.1} parent=11 // pred_check_branch
          %187 = sbr.rel (%p185) target = $region24
        $region23: #{tpu_custom_call.1} parent=11 // pred_region
          %s189 = ssub.s32 2048, 2048
          %190 = vsyncadd [#allocation6], %s189
          %s191 = sshll.u32 [#allocation7], 4
          %s192 = int_to_ptr.vmem [resolvable:$true] %s191
          %197 = dma.hbm_to_vmem [thread:$0]  %s3, 2048, %s192, [#allocation6], 64, 64, 4
        $region24: #{tpu_custom_call.1} parent=11 // pred_fallthru
          _
        // Predicated region
        $region25: #{tpu_custom_call.1} parent=11 // pred_check
          %p198 = pneg %p128
        $region26: #{tpu_custom_call.1} parent=11 // pred_check_branch
          %200 = sbr.rel (%p198) target = $region28
        $region27: #{tpu_custom_call.1} parent=11 // pred_region
          _
        $region28: #{tpu_custom_call.1} parent=11 // pred_fallthru
          _
      $region12: #{tpu_custom_call.1} parent=5 // pred_fallthru
        _
      %p201 = scmp.lt.s32.totalorder %s18, 2
      // Predicated region
      $region29: #{tpu_custom_call.1} parent=5 // pred_check
        %p202 = pneg %p201
      $region30: #{tpu_custom_call.1} parent=5 // pred_check_branch
        %204 = sbr.rel (%p202) target = $region32
      $region31: #{tpu_custom_call.1} parent=5 // pred_region
        // Predicated region
        $region33: #{tpu_custom_call.1} parent=31 // pred_check
          %p205 = pneg %p38
        $region34: #{tpu_custom_call.1} parent=31 // pred_check_branch
          %207 = sbr.rel (%p205) target = $region36
        $region35: #{tpu_custom_call.1} parent=31 // pred_region
          %s208 = sand.u32 %s28, 1
          %s209 = scalar_lea.sflag [#allocation3], %s208
          %s210 = sand.u32 %s28, 1
          %s211 = smul.addr %s210, 4
          %s212 = scalar_lea.vmem [#allocation2], %s211
          %s214 = ssub.s32 64, 64
          %215 = vsyncadd %s209, %s214
          %s216 = smul.addr %s18, 64
          %s217 = scalar_lea.hbm %s0, %s216
          %s219 = sshll.u32 %s212, 4
          %s220 = int_to_ptr.vmem [resolvable:$true] %s219
          %222 = dma.hbm_to_vmem [thread:$0]  %s217, 64, %s220, %s209
        $region36: #{tpu_custom_call.1} parent=31 // pred_fallthru
          _
      $region32: #{tpu_custom_call.1} parent=5 // pred_fallthru
        _
      %p223 = scmp.le.s32.totalorder 1, %s18
      %p224 = scmp.lt.s32.totalorder %s18, 3
      %p225 = pnand %p223, %p224
      %p226 = pneg %p225
      // Predicated region
      $region37: #{tpu_custom_call.1} parent=5 // pred_check
        _
      $region38: #{tpu_custom_call.1} parent=5 // pred_check_branch
        %228 = sbr.rel (%p225) target = $region40
      $region39: #{tpu_custom_call.1} parent=5 // pred_region
        %s229 = ssub.s32 %s18, 1
        %s230 = sand.u32 %s31, 1
        %s231 = scalar_lea.sflag [#allocation3], %s230
        %s232 = sand.u32 %s31, 1
        %s233 = smul.addr %s232, 4
        %s234 = scalar_lea.vmem [#allocation2], %s233
        // Predicated region
        $region41: #{tpu_custom_call.1} parent=39 // pred_check
          %p235 = pneg %p44
        $region42: #{tpu_custom_call.1} parent=39 // pred_check_branch
          %237 = sbr.rel (%p235) target = $region44
        $region43: #{tpu_custom_call.1} parent=39 // pred_region
          %238 = dma.done %s231, 64
        $region44: #{tpu_custom_call.1} parent=39 // pred_fallthru
          _
        // Predicated region
        $region45: #{tpu_custom_call.1} parent=39 // pred_check
          %p239 = pneg %p65
        $region46: #{tpu_custom_call.1} parent=39 // pred_check_branch
          %241 = sbr.rel (%p239) target = $region48
        $region47: #{tpu_custom_call.1} parent=39 // pred_region
          %242 = dma.done [#allocation6], 2048
        $region48: #{tpu_custom_call.1} parent=39 // pred_fallthru
          _
        // Predicated region
        $region49: #{tpu_custom_call.1} parent=39 // pred_check
          %p243 = pneg %p107
        $region50: #{tpu_custom_call.1} parent=39 // pred_check_branch
          %245 = sbr.rel (%p243) target = $region52
        $region51: #{tpu_custom_call.1} parent=39 // pred_region
          %246 = dma.done [#allocation6], 2048
        $region52: #{tpu_custom_call.1} parent=39 // pred_fallthru
          _
        %s247 = sand.u32 %s31, 1
        %s248 = scalar_lea.sflag [#allocation3], %s247
        %s249 = sand.u32 %s31, 1
        %s250 = smul.addr %s249, 4
        %s251 = scalar_lea.vmem [#allocation2], %s250
        %p252 = pneg %p44
        %p253 = pneg %p41
        %p254 = pneg %p65
        %p255 = pneg %p62
        %p256 = pneg %p86
        %p257 = pneg %p83
        %p258 = pneg %p107
        %p259 = pneg %p104
        %p260 = pneg %p128
        %p261 = pneg %p125
        %p262 = pneg %p154
        %p263 = pneg %p151
        %s264 = sand.u32 %s141, 1
        %s265 = scalar_lea.sflag [#allocation4], %s264
        %s266 = sand.u32 %s141, 1
        %s267 = smul.addr %s266, 8
        %s268 = scalar_lea.vmem [#allocation8], %s267
        %v270 = vld [vmem:[%s234] sm:$0xf]
        %v271 = vld [vmem:[#allocation5] sm:$0xff]
        %v272 = vld [vmem:[#allocation5 + $0x8] sm:$0xff]
        %v273 = vld [vmem:[#allocation5 + $0x10] sm:$0xff]
        %v274 = vld [vmem:[#allocation5 + $0x18] sm:$0xff]
        %v275 = vld [vmem:[#allocation5 + $0x20] sm:$0xff]
        %v276 = vld [vmem:[#allocation5 + $0x28] sm:$0xff]
        %v277 = vld [vmem:[#allocation5 + $0x30] sm:$0xff]
        %v278 = vld [vmem:[#allocation5 + $0x38] sm:$0xff]
        %v279 = vld [vmem:[#allocation5 + $0x40] sm:$0xff]
        %v280 = vld [vmem:[#allocation5 + $0x48] sm:$0xff]
        %v281 = vld [vmem:[#allocation5 + $0x50] sm:$0xff]
        %v282 = vld [vmem:[#allocation5 + $0x58] sm:$0xff]
        %v283 = vld [vmem:[#allocation5 + $0x60] sm:$0xff]
        %v284 = vld [vmem:[#allocation5 + $0x68] sm:$0xff]
        %v285 = vld [vmem:[#allocation5 + $0x70] sm:$0xff]
        %v286 = vld [vmem:[#allocation5 + $0x78] sm:$0xff]
        %v287 = vld [vmem:[%s2] sm:$0x3]
        %v289 = vlaneseq
        %v290 = vshrl.u32 %v289, 7
        %v291 = vsub.s32 0, %v290
        %v292 = vrot.slane %v287, %v291
        %v293 = vlaneseq
        %v294 = vshrl.u32 %v293, 7
        %v295 = vsub.s32 1, %v294
        %v296 = vrot.slane %v287, %v295
        %v315 = vunpack.c.l.b16 %v271
        %v316 = vunpack.c.h.b16 %v271
        %v317 = vunpack.c.l.b16 %v272
        %v318 = vunpack.c.h.b16 %v272
        %v319 = vunpack.c.l.b16 %v273
        %v320 = vunpack.c.h.b16 %v273
        %v321 = vunpack.c.l.b16 %v274
        %v322 = vunpack.c.h.b16 %v274
        %v323 = vunpack.c.l.b16 %v275
        %v324 = vunpack.c.h.b16 %v275
        %v325 = vunpack.c.l.b16 %v276
        %v326 = vunpack.c.h.b16 %v276
        %v327 = vunpack.c.l.b16 %v277
        %v328 = vunpack.c.h.b16 %v277
        %v329 = vunpack.c.l.b16 %v278
        %v330 = vunpack.c.h.b16 %v278
        %v331 = vunpack.c.l.b16 %v279
        %v332 = vunpack.c.h.b16 %v279
        %v333 = vunpack.c.l.b16 %v280
        %v334 = vunpack.c.h.b16 %v280
        %v335 = vunpack.c.l.b16 %v281
        %v336 = vunpack.c.h.b16 %v281
        %v337 = vunpack.c.l.b16 %v282
        %v338 = vunpack.c.h.b16 %v282
        %v339 = vunpack.c.l.b16 %v283
        %v340 = vunpack.c.h.b16 %v283
        %v341 = vunpack.c.l.b16 %v284
        %v342 = vunpack.c.h.b16 %v284
        %v343 = vunpack.c.l.b16 %v285
        %v344 = vunpack.c.h.b16 %v285
        %v345 = vunpack.c.l.b16 %v286
        %v346 = vunpack.c.h.b16 %v286
        %v347 = vpack.c.b16 %v317, %v315
        %v348 = vpack.c.b16 %v318, %v316
        %v349 = vpack.c.b16 %v321, %v319
        %v350 = vpack.c.b16 %v322, %v320
        %v351 = vpack.c.b16 %v325, %v323
        %v352 = vpack.c.b16 %v326, %v324
        %v353 = vpack.c.b16 %v329, %v327
        %v354 = vpack.c.b16 %v330, %v328
        %v355 = vpack.c.b16 %v333, %v331
        %v356 = vpack.c.b16 %v334, %v332
        %v357 = vpack.c.b16 %v337, %v335
        %v358 = vpack.c.b16 %v338, %v336
        %v359 = vpack.c.b16 %v341, %v339
        %v360 = vpack.c.b16 %v342, %v340
        %v361 = vpack.c.b16 %v345, %v343
        %v362 = vpack.c.b16 %v346, %v344
        %379 = vmatprep.subr.bf16.mxu0 %v362
        %380 = vmatpush1.bf16.msra.mxu0 %v361
        %381 = vmatprep.subr.bf16.mxu0 %v360
        %382 = vmatpush1.bf16.msra.mxu0 %v359
        %383 = vmatprep.subr.bf16.mxu0 %v358
        %384 = vmatpush1.bf16.msra.mxu0 %v357
        %385 = vmatprep.subr.bf16.mxu0 %v356
        %386 = vmatpush1.bf16.msra.mxu0 %v355
        %387 = vmatprep.subr.bf16.mxu0 %v354
        %388 = vmatpush1.bf16.msra.mxu0 %v353
        %389 = vmatprep.subr.bf16.mxu0 %v352
        %390 = vmatpush1.bf16.msra.mxu0 %v351
        %391 = vmatprep.subr.bf16.mxu0 %v350
        %392 = vmatpush1.bf16.msra.mxu0 %v349
        %393 = vmatprep.subr.bf16.mxu0 %v348
        %394 = vmatpush1.bf16.msra.mxu0 %v347
        %395 = vmatprep.subr.bf16.mxu0 0
        %396 = vmatpush2.bf16.msra.mxu0 0
        %397 = vmatprep.subr.bf16.mxu0 0
        %398 = vmatpush2.bf16.msra.mxu0 0
        %399 = vmatprep.subr.bf16.mxu0 0
        %400 = vmatpush2.bf16.msra.mxu0 0
        %401 = vmatprep.subr.bf16.mxu0 0
        %402 = vmatpush2.bf16.msra.mxu0 0
        %403 = vmatprep.subr.bf16.mxu0 0
        %404 = vmatpush2.bf16.msra.mxu0 0
        %405 = vmatprep.subr.bf16.mxu0 0
        %406 = vmatpush2.bf16.msra.mxu0 0
        %407 = vmatprep.subr.bf16.mxu0 0
        %408 = vmatpush2.bf16.msra.mxu0 0
        %409 = vmatprep.subr.bf16.mxu0 0
        %410 = vmatpush2.bf16.msra.mxu0 0
        %411 = vmatprep.mubr.bf16.mxu0 0
        %412 = vmatmul.mubr.bf16.gmra.mxu0 %v270
        %v413 = vpop.f32.mrf.mxu0
        %v414 = vadd.f32 %v292, %v413
        %v415 = vpop.f32.mrf.mxu0
        %v416 = vadd.f32 %v296, %v415
        %v417 = vpop.f32.mrf.mxu0
        %v418 = vpop.f32.mrf.mxu0
        %419 = vdwg.mxu0
        %v420 = vmax.f32 %v414, 0.0
        %v421 = vmax.f32 %v416, 0.0
        %v422 = vpack.c.bf16 %v420, %v420
        %v423 = vpack.c.bf16 %v421, %v421
        %v424 = vld [vmem:[#allocation7] sm:$0xf]
        %v425 = vld [vmem:[#allocation7 + $0x4] sm:$0xf]
        %v426 = vld [vmem:[#allocation7 + $0x8] sm:$0xf]
        %v427 = vld [vmem:[#allocation7 + $0xc] sm:$0xf]
        %v428 = vld [vmem:[#allocation7 + $0x10] sm:$0xf]
        %v429 = vld [vmem:[#allocation7 + $0x14] sm:$0xf]
        %v430 = vld [vmem:[#allocation7 + $0x18] sm:$0xf]
        %v431 = vld [vmem:[#allocation7 + $0x1c] sm:$0xf]
        %v432 = vld [vmem:[#allocation7 + $0x20] sm:$0xf]
        %v433 = vld [vmem:[#allocation7 + $0x24] sm:$0xf]
        %v434 = vld [vmem:[#allocation7 + $0x28] sm:$0xf]
        %v435 = vld [vmem:[#allocation7 + $0x2c] sm:$0xf]
        %v436 = vld [vmem:[#allocation7 + $0x30] sm:$0xf]
        %v437 = vld [vmem:[#allocation7 + $0x34] sm:$0xf]
        %v438 = vld [vmem:[#allocation7 + $0x38] sm:$0xf]
        %v439 = vld [vmem:[#allocation7 + $0x3c] sm:$0xf]
        %v440 = vld [vmem:[#allocation7 + $0x40] sm:$0xf]
        %v441 = vld [vmem:[#allocation7 + $0x44] sm:$0xf]
        %v442 = vld [vmem:[#allocation7 + $0x48] sm:$0xf]
        %v443 = vld [vmem:[#allocation7 + $0x4c] sm:$0xf]
        %v444 = vld [vmem:[#allocation7 + $0x50] sm:$0xf]
        %v445 = vld [vmem:[#allocation7 + $0x54] sm:$0xf]
        %v446 = vld [vmem:[#allocation7 + $0x58] sm:$0xf]
        %v447 = vld [vmem:[#allocation7 + $0x5c] sm:$0xf]
        %v448 = vld [vmem:[#allocation7 + $0x60] sm:$0xf]
        %v449 = vld [vmem:[#allocation7 + $0x64] sm:$0xf]
        %v450 = vld [vmem:[#allocation7 + $0x68] sm:$0xf]
        %v451 = vld [vmem:[#allocation7 + $0x6c] sm:$0xf]
        %v452 = vld [vmem:[#allocation7 + $0x70] sm:$0xf]
        %v453 = vld [vmem:[#allocation7 + $0x74] sm:$0xf]
        %v454 = vld [vmem:[#allocation7 + $0x78] sm:$0xf]
        %v455 = vld [vmem:[#allocation7 + $0x7c] sm:$0xf]
        %v456 = vld [vmem:[%s4] sm:$0x1]
        %v458 = vlaneseq
        %v459 = vshrl.u32 %v458, 7
        %v460 = vsub.s32 0, %v459
        %v461 = vrot.slane %v456, %v460
        %v495 = vunpack.c.l.b16 %v424
        %v496 = vunpack.c.l.b16 %v425
        %v497 = vunpack.c.l.b16 %v426
        %v498 = vunpack.c.l.b16 %v427
        %v499 = vunpack.c.l.b16 %v428
        %v500 = vunpack.c.l.b16 %v429
        %v501 = vunpack.c.l.b16 %v430
        %v502 = vunpack.c.l.b16 %v431
        %v503 = vunpack.c.l.b16 %v432
        %v504 = vunpack.c.l.b16 %v433
        %v505 = vunpack.c.l.b16 %v434
        %v506 = vunpack.c.l.b16 %v435
        %v507 = vunpack.c.l.b16 %v436
        %v508 = vunpack.c.l.b16 %v437
        %v509 = vunpack.c.l.b16 %v438
        %v510 = vunpack.c.l.b16 %v439
        %v511 = vunpack.c.l.b16 %v440
        %v512 = vunpack.c.l.b16 %v441
        %v513 = vunpack.c.l.b16 %v442
        %v514 = vunpack.c.l.b16 %v443
        %v515 = vunpack.c.l.b16 %v444
        %v516 = vunpack.c.l.b16 %v445
        %v517 = vunpack.c.l.b16 %v446
        %v518 = vunpack.c.l.b16 %v447
        %v519 = vunpack.c.l.b16 %v448
        %v520 = vunpack.c.l.b16 %v449
        %v521 = vunpack.c.l.b16 %v450
        %v522 = vunpack.c.l.b16 %v451
        %v523 = vunpack.c.l.b16 %v452
        %v524 = vunpack.c.l.b16 %v453
        %v525 = vunpack.c.l.b16 %v454
        %v526 = vunpack.c.l.b16 %v455
        %v527 = vpack.c.b16 %v496, %v495
        %v528 = vpack.c.b16 %v498, %v497
        %v529 = vpack.c.b16 %v500, %v499
        %v530 = vpack.c.b16 %v502, %v501
        %v531 = vpack.c.b16 %v504, %v503
        %v532 = vpack.c.b16 %v506, %v505
        %v533 = vpack.c.b16 %v508, %v507
        %v534 = vpack.c.b16 %v510, %v509
        %v535 = vpack.c.b16 %v512, %v511
        %v536 = vpack.c.b16 %v514, %v513
        %v537 = vpack.c.b16 %v516, %v515
        %v538 = vpack.c.b16 %v518, %v517
        %v539 = vpack.c.b16 %v520, %v519
        %v540 = vpack.c.b16 %v522, %v521
        %v541 = vpack.c.b16 %v524, %v523
        %v542 = vpack.c.b16 %v526, %v525
        %559 = vmatprep.subr.bf16.mxu0 0
        %560 = vmatpush1.bf16.msra.mxu0 %v534
        %561 = vmatprep.subr.bf16.mxu0 0
        %562 = vmatpush1.bf16.msra.mxu0 %v533
        %563 = vmatprep.subr.bf16.mxu0 0
        %564 = vmatpush1.bf16.msra.mxu0 %v532
        %565 = vmatprep.subr.bf16.mxu0 0
        %566 = vmatpush1.bf16.msra.mxu0 %v531
        %567 = vmatprep.subr.bf16.mxu0 0
        %568 = vmatpush1.bf16.msra.mxu0 %v530
        %569 = vmatprep.subr.bf16.mxu0 0
        %570 = vmatpush1.bf16.msra.mxu0 %v529
        %571 = vmatprep.subr.bf16.mxu0 0
        %572 = vmatpush1.bf16.msra.mxu0 %v528
        %573 = vmatprep.subr.bf16.mxu0 0
        %574 = vmatpush1.bf16.msra.mxu0 %v527
        %575 = vmatprep.subr.bf16.mxu0 0
        %576 = vmatpush2.bf16.msra.mxu0 %v542
        %577 = vmatprep.subr.bf16.mxu0 0
        %578 = vmatpush2.bf16.msra.mxu0 %v541
        %579 = vmatprep.subr.bf16.mxu0 0
        %580 = vmatpush2.bf16.msra.mxu0 %v540
        %581 = vmatprep.subr.bf16.mxu0 0
        %582 = vmatpush2.bf16.msra.mxu0 %v539
        %583 = vmatprep.subr.bf16.mxu0 0
        %584 = vmatpush2.bf16.msra.mxu0 %v538
        %585 = vmatprep.subr.bf16.mxu0 0
        %586 = vmatpush2.bf16.msra.mxu0 %v537
        %587 = vmatprep.subr.bf16.mxu0 0
        %588 = vmatpush2.bf16.msra.mxu0 %v536
        %589 = vmatprep.subr.bf16.mxu0 0
        %590 = vmatpush2.bf16.msra.mxu0 %v535
        %591 = vmatprep.mubr.bf16.mxu0 %v423
        %592 = vmatmul.mubr.bf16.gmra.mxu0 %v422
        %v593 = vpop.f32.mrf.mxu0
        %v594 = vadd.f32 %v461, %v593
        %v595 = vpop.f32.mrf.mxu0
        %v596 = vpop.f32.mrf.mxu0
        %v597 = vpop.f32.mrf.mxu0
        %598 = vdwg.mxu0
        %599 = vst [vmem:[%s268] sm:$0xff] %v594
        %s600 = sand.u32 %s141, 1
        %s601 = scalar_lea.sflag [#allocation4], %s600
        %s602 = sand.u32 %s141, 1
        %s603 = smul.addr %s602, 8
        %s604 = scalar_lea.vmem [#allocation8], %s603
        // Predicated region
        $region53: #{tpu_custom_call.1} parent=39 // pred_check
          %p605 = pneg %p151
        $region54: #{tpu_custom_call.1} parent=39 // pred_check_branch
          %607 = sbr.rel (%p605) target = $region56
        $region55: #{tpu_custom_call.1} parent=39 // pred_region
          %s609 = ssub.s32 128, 128
          %610 = vsyncadd %s601, %s609
          %s611 = smul.addr %s23, 128
          %s612 = scalar_lea.hbm %s5, %s611
          %s614 = sshll.u32 %s604, 4
          %s615 = int_to_ptr.vmem [resolvable:$true] %s614
          %617 = dma.vmem_to_hbm [thread:$0]  %s615, 128, %s612, %s601
        $region56: #{tpu_custom_call.1} parent=39 // pred_fallthru
          _
      $region40: #{tpu_custom_call.1} parent=5 // pred_fallthru
        _
      %p618 = scmp.le.s32.totalorder 2, %s18
      // Predicated region
      $region57: #{tpu_custom_call.1} parent=5 // pred_check
        %p619 = pneg %p618
      $region58: #{tpu_custom_call.1} parent=5 // pred_check_branch
        %621 = sbr.rel (%p619) target = $region60
      $region59: #{tpu_custom_call.1} parent=5 // pred_region
        %s622 = ssub.s32 %s18, 2
        // Predicated region
        $region61: #{tpu_custom_call.1} parent=59 // pred_check
          %p623 = pneg %p157
        $region62: #{tpu_custom_call.1} parent=59 // pred_check_branch
          %625 = sbr.rel (%p623) target = $region64
        $region63: #{tpu_custom_call.1} parent=59 // pred_region
          %s626 = sand.u32 %s142, 1
          %s627 = scalar_lea.sflag [#allocation4], %s626
          %s628 = sand.u32 %s142, 1
          %s629 = smul.addr %s628, 8
          %s630 = scalar_lea.vmem [#allocation8], %s629
          %631 = dma.done %s627, 128
        $region64: #{tpu_custom_call.1} parent=59 // pred_fallthru
          _
      $region60: #{tpu_custom_call.1} parent=5 // pred_fallthru
        _
    $region6: #{tpu_custom_call.1} parent=1 // loop_footer
      %s22 = sadd.s32 1, %s18
    $region7: #{tpu_custom_call.1} parent=1 // loop_footer_branch
      %17 = sbr.rel target = $region3
    $region8: #{tpu_custom_call.1} parent=1 // loop_exit
      _
    %632 = vsyncpa [#allocation3], 1
    %s633 = scalar_lea.sflag [#allocation3], 1
    %634 = vsyncpa %s633, 1
    %635 = vsyncpa [#allocation6], 1
    %636 = vsyncpa [#allocation4], 1
    %s637 = scalar_lea.sflag [#allocation4], 1
    %638 = vsyncpa %s637, 1

</llo_original>
